<compile_context>
chip_gen: v6e
topology: v6e:2x2x1
jax: 0.10.0
libtpu: 0.0.40
codegen_flags: <defaults>
</compile_context>

<pallas_src>
import functools

import jax
import jax.numpy as jnp
from jax import lax
from jax.experimental import pallas as pl
from jax.experimental.pallas import tpu as pltpu


def _cdiv(a, b):
    return (a + b - 1) // b


def _round_up(a, b):
    return _cdiv(a, b) * b


def _sublane_multiple(dtype):
    # Rows per packed sublane group: 8 for 4-byte, 16 for 2-byte, 32 for 1-byte.
    itemsize = jnp.dtype(dtype).itemsize
    return max(8, 32 // max(1, itemsize))


# ---------------------------------------------------------------------------
# Kernels
# ---------------------------------------------------------------------------

def _pad_rows_kernel(x_ref, o_ref, *, value, in_len):
    """Row-tiled path: full-width blocks, two layout-preserving static stores."""
    tile_rows, out_len = o_ref.shape
    o_ref[:, :in_len] = x_ref[...]
    o_ref[:, in_len:] = jnp.full((tile_rows, out_len - in_len), value, o_ref.dtype)


def _pad_cols_kernel(x_ref, o_ref, *, value, in_len, tile_cols):
    """Row x column tiled path for very long target_length."""
    j = pl.program_id(1)
    n_full = in_len // tile_cols      # column tiles fully covered by the input
    tail = in_len % tile_cols         # valid lanes in the boundary tile (static)

    @pl.when(j < n_full)
    def _copy():
        o_ref[...] = x_ref[...]

    if tail:
        @pl.when(j == n_full)
        def _mixed():
            lane = lax.broadcasted_iota(jnp.int32, o_ref.shape, 1)
            fill = jnp.full(o_ref.shape, value, o_ref.dtype)
            o_ref[...] = jnp.where(lane < tail, x_ref[...], fill)

    first_pad_block = n_full + (1 if tail else 0)

    @pl.when(j >= first_pad_block)
    def _fill():
        o_ref[...] = jnp.full(o_ref.shape, value, o_ref.dtype)


# ---------------------------------------------------------------------------
# pallas_call wrappers
# ---------------------------------------------------------------------------

def _pad_rows(x2d, target_length, value, *, vmem_budget_bytes, sublane):
    rows, in_len = x2d.shape
    itemsize = jnp.dtype(x2d.dtype).itemsize

    # Double-buffered in + out footprint per row (no concat temp anymore).
    bytes_per_row = (in_len + target_length) * itemsize
    max_tile_rows = vmem_budget_bytes // (2 * bytes_per_row)
    max_tile_rows = max(sublane, (max_tile_rows // sublane) * sublane)

    # Aim for >= 4 grid steps so input fetch / output writeback overlap and
    # both v7x TensorCores get at least two pipelined steps each.
    desired_steps = 4
    tile_rows = min(max_tile_rows, _round_up(_cdiv(rows, desired_steps), sublane))
    tile_rows = max(sublane, tile_rows)
    if tile_rows >= rows:
        tile_rows = rows  # full-extent row block is always a legal block shape

    grid = (_cdiv(rows, tile_rows),)
    kernel = functools.partial(_pad_rows_kernel, value=value, in_len=in_len)

    return pl.pallas_call(
        kernel,
        out_shape=jax.ShapeDtypeStruct((rows, target_length), x2d.dtype),
        grid=grid,
        in_specs=[pl.BlockSpec((tile_rows, in_len), lambda i: (i, 0))],
        out_specs=pl.BlockSpec((tile_rows, target_length), lambda i: (i, 0)),
        compiler_params=pltpu.CompilerParams(dimension_semantics=("parallel",)),
    )(x2d)


def _pad_rows_cols(x2d, target_length, value, *, vmem_budget_bytes, sublane):
    rows, in_len = x2d.shape
    itemsize = jnp.dtype(x2d.dtype).itemsize
    LANE = 128

    # Column tile: multiple of 128 lanes; keep double-buffered in+out blocks
    # within budget and around the ~1-2 MiB HBM-roofline sweet spot.
    tile_cols = vmem_budget_bytes // (4 * sublane * itemsize)
    tile_cols = max(LANE, (tile_cols // LANE) * LANE)
    tile_cols = min(tile_cols, 2048, _round_up(target_length, LANE))

    tile_rows = vmem_budget_bytes // (4 * tile_cols * itemsize)
    tile_rows = max(sublane, (tile_rows // sublane) * sublane)
    if tile_rows >= rows:
        tile_rows = rows

    n_in_col_blocks = max(1, _cdiv(in_len, tile_cols))
    grid = (_cdiv(rows, tile_rows), _cdiv(target_length, tile_cols))

    kernel = functools.partial(
        _pad_cols_kernel, value=value, in_len=in_len, tile_cols=tile_cols)

    in_spec = pl.BlockSpec(
        (tile_rows, tile_cols),
        # Clamp the column index: pure-pad column tiles map to the last valid
        # input block, so their input DMA is skipped (block index unchanged).
        lambda i, j: (i, jnp.minimum(j, n_in_col_blocks - 1)),
    )
    out_spec = pl.BlockSpec((tile_rows, tile_cols), lambda i, j: (i, j))

    return pl.pallas_call(
        kernel,
        out_shape=jax.ShapeDtypeStruct((rows, target_length), x2d.dtype),
        grid=grid,
        in_specs=[in_spec],
        out_specs=out_spec,
        compiler_params=pltpu.CompilerParams(
            dimension_semantics=("parallel", "arbitrary")),
    )(x2d)


# ---------------------------------------------------------------------------
# Public entry point (PadUpTo.forward equivalent)
# ---------------------------------------------------------------------------

def pad_up_to(x, target_length, mode: str = "constant", value: int = 0, *,
              vmem_budget_bytes: int = 8 << 20,
              min_pallas_bytes: int = 1 << 20):
    """JAX/Pallas equivalent of PadUpTo.forward."""
    if mode != "constant":
        # TODO(synk): 'reflect'/'replicate' pad modes are not implemented in the kernel.
        raise NotImplementedError("only mode='constant' is supported")

    *lead, in_len = x.shape
    pad_amt = target_length - in_len

    if pad_amt < 0:
        # torch F.pad with a negative right-pad crops the last axis.
        return x[..., :target_length]
    if pad_amt == 0:
        return x

    out_shape = (*lead, target_length)
    dtype = x.dtype
    itemsize = jnp.dtype(dtype).itemsize

    rows = 1
    for d in lead:
        rows *= d
    if rows == 0 or in_len == 0:
        return jnp.full(out_shape, value, dtype=dtype)

    out_bytes = rows * target_length * itemsize
    # Narrow outputs (<128 lanes) lower to masked partial stores and tiny
    # problems are dominated by launch overhead / an extra HBM round trip:
    # defer to jnp.pad so XLA can fuse the pad into the consumer.
    if target_length * itemsize < 512 or out_bytes < min_pallas_bytes:
        pads = [(0, 0)] * len(lead) + [(0, pad_amt)]
        return jnp.pad(x, pads, mode="constant", constant_values=value)

    x2d = x.reshape(rows, in_len)
    sublane = _sublane_multiple(dtype)

    # Minimum footprint of the full-width row-tiled path (sublane rows,
    # double-buffered in + out blocks).
    row_path_min_bytes = 2 * sublane * (in_len + target_length) * itemsize

    if row_path_min_bytes <= vmem_budget_bytes:
        out2d = _pad_rows(x2d, target_length, value,
                          vmem_budget_bytes=vmem_budget_bytes, sublane=sublane)
    else:
        # Very long target_length: full-width blocks would blow scoped VMEM,
        # so tile the lane axis as well.
        out2d = _pad_rows_cols(x2d, target_length, value,
                               vmem_budget_bytes=vmem_budget_bytes, sublane=sublane)

    return out2d.reshape(out_shape)


# ---------------------------------------------------------------------------
# Demo / self-check
# ---------------------------------------------------------------------------

if __name__ == "__main__":
    key = jax.random.PRNGKey(0)
    # (batch, channels, seq) tensor padded along its last (sequence) axis.
    B, C, L = 4, 16, 300
    x = jax.random.normal(key, (B, C, L), dtype=jnp.float32)

    def ref_pad(a, tgt, val=0):
        return jnp.pad(a, ((0, 0), (0, 0), (0, tgt - a.shape[-1])),
                       mode="constant", constant_values=val)

    # 1) Row-tiled kernel path. min_pallas_bytes=0 forces the Pallas kernel at
    #    demo scale (default defers tiny pads to XLA).
    out_a = jax.block_until_ready(pad_up_to(x, 512, min_pallas_bytes=0))
    assert out_a.shape == (B, C, 512) and out_a.dtype == x.dtype
    assert jnp.array_equal(out_a, ref_pad(x, 512))

    # Non-zero pad value.
    out_v = jax.block_until_ready(pad_up_to(x, 512, value=3, min_pallas_bytes=0))
    assert jnp.array_equal(out_v, ref_pad(x, 512, 3))

    # 2) Column-tiled kernel path, forced at demo scale with a tiny VMEM budget
    #    (normally only used for very long target_length).
    out_b = jax.block_until_ready(
        pad_up_to(x, 1024, min_pallas_bytes=0, vmem_budget_bytes=32 << 10))
    assert jnp.array_equal(out_b, ref_pad(x, 1024))

    # 3) bf16 (exercises dtype-aware sublane packing).
    xb = x.astype(jnp.bfloat16)
    out_bf = jax.block_until_ready(pad_up_to(xb, 512, min_pallas_bytes=0))
    assert jnp.array_equal(out_bf, ref_pad(xb, 512))

    # 4) Fast paths / fallbacks.
    assert pad_up_to(x, L) is x                                   # pad_amt == 0
    assert jnp.array_equal(pad_up_to(x, 128), x[..., :128])       # negative pad crops
    small = jax.random.normal(jax.random.PRNGKey(0), (2, 4, 16), dtype=jnp.float32)
    out_s = jax.block_until_ready(pad_up_to(small, 32))           # narrow -> jnp.pad fallback
    assert jnp.array_equal(out_s, jnp.pad(small, ((0, 0), (0, 0), (0, 16))))

    print("KERNEL_OK")
</pallas_src>

<mosaic_0001>
module attributes {stable_mosaic.version = 11 : i64} {
  func.func @_pad_rows_kernel(%arg0: i32, %arg1: memref<16x300xf32, #tpu.memory_space<vmem>>, %arg2: memref<16x512xf32, #tpu.memory_space<vmem>>) attributes {dimension_semantics = [#tpu.dimension_semantics<parallel>], iteration_bounds = array<i64: 4>, scalar_prefetch = 0 : i64, scratch_operands = 0 : i64, tpu.core_type = #tpu.core_type<tc>, window_params = [{transform_indices = @transform_0, window_bounds = array<i64: 16, 300>}, {transform_indices = @transform_1, window_bounds = array<i64: 16, 512>}]} {
    %c0 = arith.constant 0 : index
    %c0_0 = arith.constant 0 : index
    %0 = vector.load %arg1[%c0, %c0_0] : memref<16x300xf32, #tpu.memory_space<vmem>>, vector<16x300xf32>
    %c0_1 = arith.constant 0 : index
    %c0_2 = arith.constant 0 : index
    %1 = vector.load %arg2[%c0_1, %c0_2] : memref<16x512xf32, #tpu.memory_space<vmem>>, vector<16x300xf32>
    tpu.vector_store %arg2[%c0_1, %c0_2], %0 {strides = array<i32>} : memref<16x512xf32, #tpu.memory_space<vmem>>, vector<16x300xf32>,
    %cst = arith.constant 0.000000e+00 : f32
    %2 = vector.broadcast %cst : f32 to vector<16x212xf32>
    %c0_3 = arith.constant 0 : index
    %c300 = arith.constant 300 : index
    %3 = vector.load %arg2[%c0_3, %c300] : memref<16x512xf32, #tpu.memory_space<vmem>>, vector<16x212xf32>
    tpu.vector_store %arg2[%c0_3, %c300], %2 {strides = array<i32>} : memref<16x512xf32, #tpu.memory_space<vmem>>, vector<16x212xf32>,
    return
  }
  func.func @transform_0(%arg0: i32) -> (i32, i32) {
    %c0_i32 = arith.constant 0 : i32
    %c0_i32_0 = arith.constant 0 : i32
    return %arg0, %c0_i32 : i32, i32
  }
  func.func @transform_1(%arg0: i32) -> (i32, i32) {
    %c0_i32 = arith.constant 0 : i32
    %c0_i32_0 = arith.constant 0 : i32
    return %arg0, %c0_i32 : i32, i32
  }
}

</mosaic_0001>

<llo_original>
// kernel: tpu_custom_call.1
$region0: #{tpu_custom_call.1}
  #allocation0 [shape = 'u32[]', space=smem, size = 0x4, offset = 0x4, fixed_abs, tag = 'smem constant byte address 0x4 - core index']
  #allocation1 [shape = 'u32[144,128]{1,0:T(1,128)}', space=vmem, size = 0x12000, scoped, tag = 'internal scratch']
  %s0 = inlined_call_operand.hbm [shape: f32[64,300], index: 0, kind: input, shape index: {}]
  %s1 = inlined_call_operand.hbm [shape: f32[64,512], index: 1, kind: output, shape index: {}]
  %s2 = sld [smem:[#allocation0]]
  $region41: #{tpu_custom_call.1} parent=0
    _
  %s4 = ssub.s32 1, %s2
  %s5 = scalar_select 0, %s4, %s2
  $region1: #{tpu_custom_call.1} parent=0
    #allocation2 [shape = 'u8[49152]{0}', space=vmem, size = 0xc000, scoped, tag = 'input window, operand 0']
    #allocation3 [shape = 's32[2]{0}', space=sflag, size = 0x8, scoped, tag = 'scoped memory for tpu_custom_call.1']
    #allocation4 [shape = 's32[2]{0}', space=sflag, size = 0x8, scoped, tag = 'scoped memory for tpu_custom_call.1']
    #allocation5 [shape = 'u8[65536]{0}', space=vmem, size = 0x10000, scoped, tag = 'output window, operand 0']
    %6 = vsyncpa [#allocation3], 0
    %s7 = scalar_lea.sflag [#allocation3], 1
    %8 = vsyncpa %s7, 0
    %9 = vsyncpa [#allocation4], 0
    %s10 = scalar_lea.sflag [#allocation4], 1
    %11 = vsyncpa %s10, 0
    loop: start=0, step=1, limit=6
    $region2: #{tpu_custom_call.1} parent=1 // loop_pre_header
      _
    $region3: #{tpu_custom_call.1} parent=1 // loop_header
      %s13 = sphi 0, %s17
      %p14 = scmp.ge.s32.totalorder %s13, 6
      %s23 = sphi 0, %s25
      %s26 = sphi 0, %s23
      %s27 = sphi 0, %s26
      %s43 = sphi 0, %s27
      %s49 = sphi 0, %s51
      %s52 = sphi 0, %s49
      %s53 = sphi 0, %s52
      %s69 = sphi 0, %s53
    $region4: #{tpu_custom_call.1} parent=1 // loop_header_branch
      %16 = sbr.rel (%p14) target = $region8
    $region5: #{tpu_custom_call.1} parent=1 // loop_body
      %s18 = ssub.s32 %s13, 1
      %s19 = ssub.s32 %s13, 2
      %s20 = sadd.s32 %s13, 1
      %s21 = ssub.s32 %s13, %s20
      %p22 = scmp.eq.s32.totalorder %s21, 0
      %s24 = sadd.s32 %s23, 1
      %s25 = scalar_select %p22, %s23, %s24
      %p28 = pneg %p22
      %p29 = scmp.eq.s32.totalorder %s13, 3
      %p30 = por %p28, %p29
      %p31 = scmp.ne.s32.totalorder %s23, %s26
      %p32 = scmp.eq.s32.totalorder %s13, 0
      %p33 = por %p31, %p32
      %p34 = scmp.ne.s32.totalorder %s23, %s26
      %p35 = scmp.eq.s32.totalorder %s18, 3
      %p36 = por %p34, %p35
      %p37 = scmp.ne.s32.totalorder %s26, %s27
      %p38 = scmp.eq.s32.totalorder %s18, 0
      %p39 = por %p37, %p38
      %p40 = scmp.ne.s32.totalorder %s26, %s27
      %p41 = scmp.eq.s32.totalorder %s19, 3
      %p42 = por %p40, %p41
      %p44 = scmp.ne.s32.totalorder %s27, %s43
      %p45 = scmp.eq.s32.totalorder %s19, 0
      %p46 = por %p44, %p45
      %s47 = ssub.s32 %s13, %s20
      %p48 = scmp.eq.s32.totalorder %s47, 0
      %s50 = sadd.s32 %s49, 1
      %s51 = scalar_select %p48, %s49, %s50
      %p54 = pneg %p48
      %p55 = scmp.eq.s32.totalorder %s13, 3
      %p56 = por %p54, %p55
      %p57 = scmp.ne.s32.totalorder %s49, %s52
      %p58 = scmp.eq.s32.totalorder %s13, 0
      %p59 = por %p57, %p58
      %p60 = scmp.ne.s32.totalorder %s49, %s52
      %p61 = scmp.eq.s32.totalorder %s18, 3
      %p62 = por %p60, %p61
      %p63 = scmp.ne.s32.totalorder %s52, %s53
      %p64 = scmp.eq.s32.totalorder %s18, 0
      %p65 = por %p63, %p64
      %p66 = scmp.ne.s32.totalorder %s52, %s53
      %p67 = scmp.eq.s32.totalorder %s19, 3
      %p68 = por %p66, %p67
      %p70 = scmp.ne.s32.totalorder %s53, %s69
      %p71 = scmp.eq.s32.totalorder %s19, 0
      %p72 = por %p70, %p71
      %p73 = scmp.le.s32.totalorder 1, %s13
      %p74 = scmp.lt.s32.totalorder %s13, 5
      %p75 = pnand %p73, %p74
      %p76 = pneg %p75
      // Predicated region
      $region9: #{tpu_custom_call.1} parent=5 // pred_check
        _
      $region10: #{tpu_custom_call.1} parent=5 // pred_check_branch
        %78 = sbr.rel (%p75) target = $region12
      $region11: #{tpu_custom_call.1} parent=5 // pred_region
        %s79 = ssub.s32 %s13, 1
      $region12: #{tpu_custom_call.1} parent=5 // pred_fallthru
        _
      %p80 = scmp.lt.s32.totalorder %s13, 4
      // Predicated region
      $region13: #{tpu_custom_call.1} parent=5 // pred_check
        %p81 = pneg %p80
      $region14: #{tpu_custom_call.1} parent=5 // pred_check_branch
        %83 = sbr.rel (%p81) target = $region16
      $region15: #{tpu_custom_call.1} parent=5 // pred_region
        // Predicated region
        $region17: #{tpu_custom_call.1} parent=15 // pred_check
          %p84 = pneg %p33
        $region18: #{tpu_custom_call.1} parent=15 // pred_check_branch
          %86 = sbr.rel (%p84) target = $region20
        $region19: #{tpu_custom_call.1} parent=15 // pred_region
          %s87 = sand.u32 %s23, 1
          %s88 = scalar_lea.sflag [#allocation3], %s87
          %s89 = sand.u32 %s23, 1
          %s90 = smul.addr %s89, 48
          %s91 = scalar_lea.vmem [#allocation2], %s90
          %s92 = smul.u32 2, %s13
          %s94 = ssub.s32 768, 768
          %95 = vsyncadd %s88, %s94
          %s96 = smul.addr %s92, 3
          %s97 = smul.addr %s96, 128
          %s98 = scalar_lea.hbm %s0, %s97
          %s99 = sshll.u32 %s91, 4
          %s100 = int_to_ptr.vmem [resolvable:$true] %s99
          %105 = dma.hbm_to_vmem [thread:$0]  %s98, 768, %s100, %s88, 384, 384, 24
        $region20: #{tpu_custom_call.1} parent=15 // pred_fallthru
          _
      $region16: #{tpu_custom_call.1} parent=5 // pred_fallthru
        _
      %p106 = scmp.le.s32.totalorder 1, %s13
      %p107 = scmp.lt.s32.totalorder %s13, 5
      %p108 = pnand %p106, %p107
      %p109 = pneg %p108
      // Predicated region
      $region21: #{tpu_custom_call.1} parent=5 // pred_check
        _
      $region22: #{tpu_custom_call.1} parent=5 // pred_check_branch
        %111 = sbr.rel (%p108) target = $region24
      $region23: #{tpu_custom_call.1} parent=5 // pred_region
        %s112 = ssub.s32 %s13, 1
        %s113 = sand.u32 %s26, 1
        %s114 = scalar_lea.sflag [#allocation3], %s113
        %s115 = sand.u32 %s26, 1
        %s116 = smul.addr %s115, 48
        %s117 = scalar_lea.vmem [#allocation2], %s116
        // Predicated region
        $region25: #{tpu_custom_call.1} parent=23 // pred_check
          %p118 = pneg %p39
        $region26: #{tpu_custom_call.1} parent=23 // pred_check_branch
          %120 = sbr.rel (%p118) target = $region28
        $region27: #{tpu_custom_call.1} parent=23 // pred_region
          %121 = dma.done %s114, 768
        $region28: #{tpu_custom_call.1} parent=23 // pred_fallthru
          _
        %s122 = sand.u32 %s26, 1
        %s123 = scalar_lea.sflag [#allocation3], %s122
        %s124 = sand.u32 %s26, 1
        %s125 = smul.addr %s124, 48
        %s126 = scalar_lea.vmem [#allocation2], %s125
        %p127 = pneg %p39
        %p128 = pneg %p36
        %p129 = pneg %p65
        %p130 = pneg %p62
        %s131 = sand.u32 %s52, 1
        %s132 = scalar_lea.sflag [#allocation4], %s131
        %s133 = sand.u32 %s52, 1
        %s134 = smul.addr %s133, 64
        %s135 = scalar_lea.vmem [#allocation5], %s134
        %s136 = smul.u32 2, %s18
        %s137 = smul.u32 2, %s18
        %v138 = vld [vmem:[%s117] sm:$0xff]
        %v139 = vld [vmem:[%s117 + $0x8] sm:$0xff]
        %v140 = vld [vmem:[%s117 + $0x10] sm:$0xff]
        %v141 = vld [vmem:[%s117 + $0x18] sm:$0xff]
        %v142 = vld [vmem:[%s117 + $0x20] sm:$0xff]
        %v143 = vld [vmem:[%s117 + $0x28] sm:$0xff]
        %144 = vst [vmem:[%s135] sm:$0xff] %v138
        %145 = vst [vmem:[%s135 + $0x8] sm:$0xff] %v139
        %vm146 = vcmask 359424
        %147 = vst.msk [vmem:[%s135 + $0x10] sm:$0xff] %vm146, %v140
        %148 = vst [vmem:[%s135 + $0x20] sm:$0xff] %v141
        %149 = vst [vmem:[%s135 + $0x28] sm:$0xff] %v142
        %150 = vst.msk [vmem:[%s135 + $0x30] sm:$0xff] %vm146, %v143
        %vm151 = vcmask 1047904
        %152 = vst.msk [vmem:[%s135 + $0x10] sm:$0xff] %vm151, 0.0
        %153 = vst [vmem:[%s135 + $0x18] sm:$0xff] 0.0
        %154 = vst.msk [vmem:[%s135 + $0x30] sm:$0xff] %vm151, 0.0
        %155 = vst [vmem:[%s135 + $0x38] sm:$0xff] 0.0
        %s156 = sand.u32 %s52, 1
        %s157 = scalar_lea.sflag [#allocation4], %s156
        %s158 = sand.u32 %s52, 1
        %s159 = smul.addr %s158, 64
        %s160 = scalar_lea.vmem [#allocation5], %s159
        // Predicated region
        $region29: #{tpu_custom_call.1} parent=23 // pred_check
          %p161 = pneg %p62
        $region30: #{tpu_custom_call.1} parent=23 // pred_check_branch
          %163 = sbr.rel (%p161) target = $region32
        $region31: #{tpu_custom_call.1} parent=23 // pred_region
          %s164 = smul.u32 2, %s18
          %s166 = ssub.s32 1024, 1024
          %167 = vsyncadd %s157, %s166
          %s168 = smul.addr %s164, 4
          %s169 = smul.addr %s168, 128
          %s170 = scalar_lea.hbm %s1, %s169
          %s171 = sshll.u32 %s160, 4
          %s172 = int_to_ptr.vmem [resolvable:$true] %s171
          %177 = dma.vmem_to_hbm [thread:$0]  %s172, 1024, %s170, %s157, 512, 512, 32
        $region32: #{tpu_custom_call.1} parent=23 // pred_fallthru
          _
      $region24: #{tpu_custom_call.1} parent=5 // pred_fallthru
        _
      %p178 = scmp.le.s32.totalorder 2, %s13
      // Predicated region
      $region33: #{tpu_custom_call.1} parent=5 // pred_check
        %p179 = pneg %p178
      $region34: #{tpu_custom_call.1} parent=5 // pred_check_branch
        %181 = sbr.rel (%p179) target = $region36
      $region35: #{tpu_custom_call.1} parent=5 // pred_region
        %s182 = ssub.s32 %s13, 2
        // Predicated region
        $region37: #{tpu_custom_call.1} parent=35 // pred_check
          %p183 = pneg %p68
        $region38: #{tpu_custom_call.1} parent=35 // pred_check_branch
          %185 = sbr.rel (%p183) target = $region40
        $region39: #{tpu_custom_call.1} parent=35 // pred_region
          %s186 = sand.u32 %s53, 1
          %s187 = scalar_lea.sflag [#allocation4], %s186
          %s188 = sand.u32 %s53, 1
          %s189 = smul.addr %s188, 64
          %s190 = scalar_lea.vmem [#allocation5], %s189
          %191 = dma.done %s187, 1024
        $region40: #{tpu_custom_call.1} parent=35 // pred_fallthru
          _
      $region36: #{tpu_custom_call.1} parent=5 // pred_fallthru
        _
    $region6: #{tpu_custom_call.1} parent=1 // loop_footer
      %s17 = sadd.s32 1, %s13
    $region7: #{tpu_custom_call.1} parent=1 // loop_footer_branch
      %12 = sbr.rel target = $region3
    $region8: #{tpu_custom_call.1} parent=1 // loop_exit
      _
    %192 = vsyncpa [#allocation3], 1
    %s193 = scalar_lea.sflag [#allocation3], 1
    %194 = vsyncpa %s193, 1
    %195 = vsyncpa [#allocation4], 1
    %s196 = scalar_lea.sflag [#allocation4], 1
    %197 = vsyncpa %s196, 1

</llo_original>
